<compile_context>
chip_gen: v7x
topology: tpu7x:2x2x1
jax: 0.10.0
libtpu: 0.0.40
codegen_flags: <defaults>
</compile_context>

<pallas_src>
import functools

import jax
import jax.numpy as jnp
from jax import lax
from jax.experimental import pallas as pl
from jax.experimental.pallas import tpu as pltpu

_LN_EPS = 1e-6
_INV_SQRT2 = 0.7071067811865476


def _ffn_kernel(x_ref, w1_ref, b1_ref, w2_ref, b2_ref, g_ref, beta_ref, o_ref,
                *, matmul_dtype, precise_f32):
    x = x_ref[...].astype(jnp.float32)                      # (tm, d_in)
    inv_d = 1.0 / x.shape[-1]

    # --- LayerNorm (pre-norm, eps=1e-6). Two independent reductions (sum and
    # sum of squares) instead of the serial mean -> center -> var chain. ---
    sx = jnp.sum(x, axis=-1, keepdims=True)
    sxx = jnp.sum(x * x, axis=-1, keepdims=True)
    mean = sx * inv_d
    var = jnp.maximum(sxx * inv_d - mean * mean, 0.0)
    xn = (x - mean) * lax.rsqrt(var + _LN_EPS)
    xn = xn * g_ref[...] + beta_ref[...]                    # params already f32

    precision = lax.Precision.HIGHEST if precise_f32 else None

    # --- w_1: d_in -> d_hid (MXU, f32 accumulation), exact erf GELU. ---
    h = jnp.dot(xn.astype(matmul_dtype), w1_ref[...],
                preferred_element_type=jnp.float32, precision=precision)
    h = h + b1_ref[...]
    h = 0.5 * h * (1.0 + lax.erf(h * _INV_SQRT2))           # F.gelu (erf form)

    # TODO(synk): dropout is stochastic training-time behavior; modeled as
    # identity (eval-mode semantics).

    # --- w_2: d_hid -> d_in (MXU, f32 accumulation). ---
    y = jnp.dot(h.astype(matmul_dtype), w2_ref[...],
                preferred_element_type=jnp.float32, precision=precision)
    y = y + b2_ref[...]

    # Residual: re-read the already-resident input tile (no f32 copy kept live
    # across both matmuls -> less vreg/VMEM pressure).
    o_ref[...] = (y + x_ref[...].astype(jnp.float32)).astype(o_ref.dtype)


def _round_up(a, m):
    return ((a + m - 1) // m) * m


def _vmem_limit_bytes_auto():
    """Capacity minus 16 MiB headroom: ~112 MiB on v5e/v6e (128 MiB VMEM),
    ~48 MiB on v7x (64 MiB per TensorCore)."""
    cap = None
    try:
        cap = int(getattr(pltpu.get_tpu_info(), "vmem_capacity_bytes", 0)) or None
    except Exception:
        cap = None
    if cap is None:
        cap = 64 * 1024 * 1024      # conservative fallback (v7x per-TC)
    return max(32 * 1024 * 1024, cap - 16 * 1024 * 1024)


def _pick_tile_rows(n, d_in, d_hid, x_bytes, mm_bytes, vmem_limit):
    """Largest row tile whose working set fits in ~70% of the VMEM limit."""
    resident = 2 * d_in * d_hid * mm_bytes             # W1 + W2, single-buffered
    resident += 4 * (2 * d_in + d_hid) * 4             # biases / gamma / beta (f32)
    budget = int(vmem_limit * 0.7) - resident
    per_row = 2 * d_in * x_bytes                        # input tile (2 pipeline bufs)
    per_row += 2 * d_in * x_bytes                       # output tile (2 pipeline bufs)
    per_row += d_in * (4 + mm_bytes)                    # xn f32 + matmul-dtype cast
    per_row += d_hid * (4 + mm_bytes)                   # h  f32 + matmul-dtype cast
    per_row += d_in * 4                                 # y / residual-add temp (f32)
    tm = 8
    for cand in (1024, 512, 256, 128, 64, 32, 16, 8):
        if cand * per_row <= budget:
            tm = cand
            break
    # TODO(synk): if the resident weights alone exceed the budget (very large
    # d_hid on v7x), a second "arbitrary" grid axis over d_hid blocks with an
    # f32 accumulator scratch would be needed instead of full weight residency.
    return tm


def positionwise_feed_forward(x, w1, b1, w2, b2, gamma, beta, *,
                              matmul_dtype=jnp.bfloat16,
                              tm=None,
                              vmem_limit_bytes=None,
                              single_buffer_params=True):
    """Fused pre-norm FFN:  out = x + (gelu(LN(x) @ W1 + b1) @ W2 + b2).

    x: (batch, seq, d_in).  w1: (d_in, d_hid), w2: (d_hid, d_in) -- row-major
    (in, out) layout, i.e. the transposes of the PyTorch nn.Linear `.weight`
    tensors, so the kernel computes plain `x @ W` matmuls.

    matmul_dtype: MXU operand dtype (accumulation is always f32). bf16 runs
    the MXU at native rate and halves resident-weight VMEM/DMA; pass
    jnp.float32 for tight (HIGHEST precision) parity with f32 PyTorch.
    """
    batch, seq, d_in = x.shape
    d_hid = w1.shape[1]
    n = batch * seq

    matmul_dtype = jnp.dtype(matmul_dtype)
    precise_f32 = matmul_dtype == jnp.dtype(jnp.float32)
    mm_bytes = matmul_dtype.itemsize
    x_bytes = jnp.dtype(x.dtype).itemsize

    if vmem_limit_bytes is None:
        vmem_limit_bytes = _vmem_limit_bytes_auto()
    if tm is None:
        tm = _pick_tile_rows(n, d_in, d_hid, x_bytes, mm_bytes, vmem_limit_bytes)
    tm = max(8, min(_round_up(tm, 8), _round_up(n, 8)))
    # Ragged last block: Pallas pad-reads the input and masks the output store,
    # so there is no wrapper-side pad / slice (no extra HBM passes).
    grid = (pl.cdiv(n, tm),)

    x2d = x.reshape(n, d_in)                 # metadata-only reshape (contiguous)

    # Cast weights ONCE here (not per grid step inside the kernel); LN/bias
    # params go in as f32 since the epilogue math is f32.
    w1c = w1.astype(matmul_dtype)
    w2c = w2.astype(matmul_dtype)
    b1_2d = b1.reshape(1, d_hid).astype(jnp.float32)
    b2_2d = b2.reshape(1, d_in).astype(jnp.float32)
    g_2d = gamma.reshape(1, d_in).astype(jnp.float32)
    beta_2d = beta.reshape(1, d_in).astype(jnp.float32)

    kernel = functools.partial(_ffn_kernel, matmul_dtype=matmul_dtype,
                               precise_f32=precise_f32)

    cost = pl.CostEstimate(
        flops=4 * n * d_in * d_hid + 10 * n * d_in,
        transcendentals=n * d_hid + n,
        bytes_accessed=(2 * n * d_in * x_bytes
                        + 2 * d_in * d_hid * mm_bytes
                        + (2 * d_in + d_hid) * 4),
    )

    def _run(single_buffer):
        # Constant-index_map blocks are DMA'd once and stay VMEM-resident for
        # every grid step; Buffered(1) drops their useless second buffer.
        const_kw = ({"pipeline_mode": pl.Buffered(buffer_count=1)}
                    if single_buffer else {})
        grid_spec = pltpu.PrefetchScalarGridSpec(
            num_scalar_prefetch=0,
            grid=grid,
            in_specs=[
                pl.BlockSpec((tm, d_in), lambda i: (i, 0)),                  # x tile
                pl.BlockSpec((d_in, d_hid), lambda i: (0, 0), **const_kw),   # W1
                pl.BlockSpec((1, d_hid), lambda i: (0, 0), **const_kw),      # b1
                pl.BlockSpec((d_hid, d_in), lambda i: (0, 0), **const_kw),   # W2
                pl.BlockSpec((1, d_in), lambda i: (0, 0), **const_kw),       # b2
                pl.BlockSpec((1, d_in), lambda i: (0, 0), **const_kw),       # gamma
                pl.BlockSpec((1, d_in), lambda i: (0, 0), **const_kw),       # beta
            ],
            out_specs=pl.BlockSpec((tm, d_in), lambda i: (i, 0)),
        )
        return pl.pallas_call(
            kernel,
            out_shape=jax.ShapeDtypeStruct((n, d_in), x.dtype),
            grid_spec=grid_spec,
            compiler_params=pltpu.CompilerParams(
                # Row tiles are independent -> shard across TCs where available.
                dimension_semantics=("parallel",),
                vmem_limit_bytes=int(vmem_limit_bytes),
            ),
            cost_estimate=cost,
        )(x2d, w1c, b1_2d, w2c, b2_2d, g_2d, beta_2d)

    try:
        out = _run(single_buffer_params)
    except Exception:
        if not single_buffer_params:
            raise
        out = _run(False)    # fallback if this jax build rejects Buffered(1)

    return out.reshape(batch, seq, d_in)


def _reference(x, w1, b1, w2, b2, gamma, beta):
    xf = x.astype(jnp.float32)
    mean = jnp.mean(xf, axis=-1, keepdims=True)
    var = jnp.mean((xf - mean) ** 2, axis=-1, keepdims=True)
    xn = (xf - mean) / jnp.sqrt(var + 1e-6) * gamma + beta
    h = jax.nn.gelu(jnp.dot(xn, w1, precision=lax.Precision.HIGHEST) + b1,
                    approximate=False)
    y = jnp.dot(h, w2, precision=lax.Precision.HIGHEST) + b2
    return (y + xf).astype(x.dtype)


if __name__ == "__main__":
    def make_params(key, d_in, d_hid):
        kw1, kb1, kw2, kb2, kg, kbeta = jax.random.split(key, 6)
        w1 = jax.random.normal(kw1, (d_in, d_hid), jnp.float32) * (d_in ** -0.5)
        b1 = jax.random.normal(kb1, (d_hid,), jnp.float32) * 0.01
        w2 = jax.random.normal(kw2, (d_hid, d_in), jnp.float32) * (d_hid ** -0.5)
        b2 = jax.random.normal(kb2, (d_in,), jnp.float32) * 0.01
        gamma = 1.0 + 0.1 * jax.random.normal(kg, (d_in,), jnp.float32)
        beta = 0.05 * jax.random.normal(kbeta, (d_in,), jnp.float32)
        return w1, b1, w2, b2, gamma, beta

    key = jax.random.PRNGKey(0)
    kx, kp, kx2, kp2 = jax.random.split(key, 4)

    # Main check: small but lane-dense feature dims (d_in multiple of 128).
    batch, seq, d_in, d_hid = 2, 8, 128, 256
    x = jax.random.normal(kx, (batch, seq, d_in), dtype=jnp.float32)
    params = make_params(kp, d_in, d_hid)
    ref = _reference(x, *params)

    # 1) Default path: bf16 MXU operands, f32 accumulation.
    out = jax.block_until_ready(positionwise_feed_forward(x, *params))
    assert out.shape == (batch, seq, d_in)
    assert jnp.allclose(out, ref, atol=5e-2, rtol=5e-2), "bf16-MXU mismatch vs reference"

    # 2) f32 MXU operands (HIGHEST precision): tight parity with the reference.
    out32 = jax.block_until_ready(
        positionwise_feed_forward(x, *params, matmul_dtype=jnp.float32))
    assert jnp.allclose(out32, ref, atol=1e-4, rtol=1e-4), "f32 mismatch vs reference"

    # 3) Ragged row count (batch*seq not a multiple of 8 / the tile): exercises
    #    the in-kernel masked tail block (no wrapper-side pad/slice anymore).
    x_odd = x[:, :7, :]
    ref_odd = _reference(x_odd, *params)
    out_odd = jax.block_until_ready(
        positionwise_feed_forward(x_odd, *params, matmul_dtype=jnp.float32))
    assert out_odd.shape == (batch, 7, d_in)
    assert jnp.allclose(out_odd, ref_odd, atol=1e-4, rtol=1e-4), "ragged mismatch vs reference"

    # 4) Tiny, lane-starved feature dims (d_in=32, d_hid=64) stay correct
    #    (full-dim feature blocks), even though the fused kernel is only
    #    bandwidth/MXU-efficient for d_in >= 128.
    d_in_s, d_hid_s = 32, 64
    x_s = jax.random.normal(kx2, (batch, seq, d_in_s), dtype=jnp.float32)
    params_s = make_params(kp2, d_in_s, d_hid_s)
    ref_s = _reference(x_s, *params_s)
    out_s = jax.block_until_ready(
        positionwise_feed_forward(x_s, *params_s, matmul_dtype=jnp.float32))
    assert jnp.allclose(out_s, ref_s, atol=1e-4, rtol=1e-4), "small-dims mismatch vs reference"

    print("KERNEL_OK")
</pallas_src>

<mosaic_0001>
module attributes {stable_mosaic.version = 11 : i64} {
  func.func @_ffn_kernel(%arg0: i32, %arg1: memref<16x128xf32, #tpu.memory_space<vmem>>, %arg2: memref<128x256xbf16, #tpu.memory_space<vmem>>, %arg3: memref<1x256xf32, #tpu.memory_space<vmem>>, %arg4: memref<256x128xbf16, #tpu.memory_space<vmem>>, %arg5: memref<1x128xf32, #tpu.memory_space<vmem>>, %arg6: memref<1x128xf32, #tpu.memory_space<vmem>>, %arg7: memref<1x128xf32, #tpu.memory_space<vmem>>, %arg8: memref<16x128xf32, #tpu.memory_space<vmem>>) attributes {dimension_semantics = [#tpu.dimension_semantics<parallel>], iteration_bounds = array<i64: 1>, scalar_prefetch = 0 : i64, scratch_operands = 0 : i64, tpu.core_type = #tpu.core_type<tc>, window_params = [{transform_indices = @transform_0, window_bounds = array<i64: 16, 128>}, {pipeline_mode = #tpu.pipeline_mode<synchronous>, transform_indices = @transform_1, window_bounds = array<i64: 128, 256>}, {pipeline_mode = #tpu.pipeline_mode<synchronous>, transform_indices = @transform_2, window_bounds = array<i64: 1, 256>}, {pipeline_mode = #tpu.pipeline_mode<synchronous>, transform_indices = @transform_3, window_bounds = array<i64: 256, 128>}, {pipeline_mode = #tpu.pipeline_mode<synchronous>, transform_indices = @transform_4, window_bounds = array<i64: 1, 128>}, {pipeline_mode = #tpu.pipeline_mode<synchronous>, transform_indices = @transform_5, window_bounds = array<i64: 1, 128>}, {pipeline_mode = #tpu.pipeline_mode<synchronous>, transform_indices = @transform_6, window_bounds = array<i64: 1, 128>}, {transform_indices = @transform_7, window_bounds = array<i64: 16, 128>}]} {
    %c0 = arith.constant 0 : index
    %c0_0 = arith.constant 0 : index
    %0 = vector.load %arg1[%c0, %c0_0] : memref<16x128xf32, #tpu.memory_space<vmem>>, vector<16x128xf32>
    %cst = arith.constant dense<0.000000e+00> : vector<16xf32>
    %1 = vector.multi_reduction <add>, %0, %cst [1] : vector<16x128xf32> to vector<16xf32>
    %2 = vector.shape_cast %1 : vector<16xf32> to vector<16x1xf32>
    %3 = arith.mulf %0, %0 : vector<16x128xf32>
    %cst_1 = arith.constant dense<0.000000e+00> : vector<16xf32>
    %4 = vector.multi_reduction <add>, %3, %cst_1 [1] : vector<16x128xf32> to vector<16xf32>
    %5 = vector.shape_cast %4 : vector<16xf32> to vector<16x1xf32>
    %cst_2 = arith.constant 7.812500e-03 : f32
    %6 = vector.broadcast %cst_2 : f32 to vector<16x1xf32>
    %7 = arith.mulf %2, %6 : vector<16x1xf32>
    %cst_3 = arith.constant 7.812500e-03 : f32
    %8 = vector.broadcast %cst_3 : f32 to vector<16x1xf32>
    %9 = arith.mulf %5, %8 : vector<16x1xf32>
    %10 = arith.mulf %7, %7 : vector<16x1xf32>
    %11 = arith.subf %9, %10 : vector<16x1xf32>
    %cst_4 = arith.constant 0.000000e+00 : f32
    %12 = vector.broadcast %cst_4 : f32 to vector<16x1xf32>
    %13 = arith.maximumf %11, %12 : vector<16x1xf32>
    %14 = vector.broadcast %7 : vector<16x1xf32> to vector<16x128xf32>
    %15 = arith.subf %0, %14 : vector<16x128xf32>
    %cst_5 = arith.constant 9.99999997E-7 : f32
    %16 = vector.broadcast %cst_5 : f32 to vector<16x1xf32>
    %17 = arith.addf %13, %16 : vector<16x1xf32>
    %18 = math.rsqrt %17 : vector<16x1xf32>
    %19 = vector.broadcast %18 : vector<16x1xf32> to vector<16x128xf32>
    %20 = arith.mulf %15, %19 : vector<16x128xf32>
    %c0_6 = arith.constant 0 : index
    %c0_7 = arith.constant 0 : index
    %21 = vector.load %arg6[%c0_6, %c0_7] : memref<1x128xf32, #tpu.memory_space<vmem>>, vector<1x128xf32>
    %22 = vector.broadcast %21 : vector<1x128xf32> to vector<16x128xf32>
    %23 = arith.mulf %20, %22 : vector<16x128xf32>
    %c0_8 = arith.constant 0 : index
    %c0_9 = arith.constant 0 : index
    %24 = vector.load %arg7[%c0_8, %c0_9] : memref<1x128xf32, #tpu.memory_space<vmem>>, vector<1x128xf32>
    %25 = vector.broadcast %24 : vector<1x128xf32> to vector<16x128xf32>
    %26 = arith.addf %23, %25 : vector<16x128xf32>
    %27 = arith.truncf %26 : vector<16x128xf32> to vector<16x128xbf16>
    %c0_10 = arith.constant 0 : index
    %c0_11 = arith.constant 0 : index
    %28 = vector.load %arg2[%c0_10, %c0_11] : memref<128x256xbf16, #tpu.memory_space<vmem>>, vector<128x256xbf16>
    %cst_12 = arith.constant dense<0.000000e+00> : vector<16x256xf32>
    %29 = tpu.matmul %27, %28, %cst_12 {dimension_numbers = #tpu.dot_dimension_numbers<[1], [0], [0], [1], [0, 0, 1, 1], [], []>} : vector<16x128xbf16>, vector<128x256xbf16>, vector<16x256xf32> -> vector<16x256xf32>
    %c0_13 = arith.constant 0 : index
    %c0_14 = arith.constant 0 : index
    %30 = vector.load %arg3[%c0_13, %c0_14] : memref<1x256xf32, #tpu.memory_space<vmem>>, vector<1x256xf32>
    %31 = vector.broadcast %30 : vector<1x256xf32> to vector<16x256xf32>
    %32 = arith.addf %29, %31 : vector<16x256xf32>
    %cst_15 = arith.constant 5.000000e-01 : f32
    %33 = vector.broadcast %cst_15 : f32 to vector<16x256xf32>
    %34 = arith.mulf %33, %32 : vector<16x256xf32>
    %cst_16 = arith.constant 0.707106769 : f32
    %35 = vector.broadcast %cst_16 : f32 to vector<16x256xf32>
    %36 = arith.mulf %32, %35 : vector<16x256xf32>
    %37 = math.erf %36 : vector<16x256xf32>
    %cst_17 = arith.constant 1.000000e+00 : f32
    %38 = vector.broadcast %cst_17 : f32 to vector<16x256xf32>
    %39 = arith.addf %38, %37 : vector<16x256xf32>
    %40 = arith.mulf %34, %39 : vector<16x256xf32>
    %41 = arith.truncf %40 : vector<16x256xf32> to vector<16x256xbf16>
    %c0_18 = arith.constant 0 : index
    %c0_19 = arith.constant 0 : index
    %42 = vector.load %arg4[%c0_18, %c0_19] : memref<256x128xbf16, #tpu.memory_space<vmem>>, vector<256x128xbf16>
    %cst_20 = arith.constant dense<0.000000e+00> : vector<16x128xf32>
    %43 = tpu.matmul %41, %42, %cst_20 {dimension_numbers = #tpu.dot_dimension_numbers<[1], [0], [0], [1], [0, 0, 1, 1], [], []>} : vector<16x256xbf16>, vector<256x128xbf16>, vector<16x128xf32> -> vector<16x128xf32>
    %c0_21 = arith.constant 0 : index
    %c0_22 = arith.constant 0 : index
    %44 = vector.load %arg5[%c0_21, %c0_22] : memref<1x128xf32, #tpu.memory_space<vmem>>, vector<1x128xf32>
    %45 = vector.broadcast %44 : vector<1x128xf32> to vector<16x128xf32>
    %46 = arith.addf %43, %45 : vector<16x128xf32>
    %c0_23 = arith.constant 0 : index
    %c0_24 = arith.constant 0 : index
    %47 = vector.load %arg1[%c0_23, %c0_24] : memref<16x128xf32, #tpu.memory_space<vmem>>, vector<16x128xf32>
    %48 = arith.addf %46, %47 : vector<16x128xf32>
    %c0_25 = arith.constant 0 : index
    %c0_26 = arith.constant 0 : index
    %49 = vector.load %arg8[%c0_25, %c0_26] : memref<16x128xf32, #tpu.memory_space<vmem>>, vector<16x128xf32>
    tpu.vector_store %arg8[%c0_25, %c0_26], %48 {strides = array<i32>} : memref<16x128xf32, #tpu.memory_space<vmem>>, vector<16x128xf32>,
    return
  }
  func.func @transform_0(%arg0: i32) -> (i32, i32) {
    %c0_i32 = arith.constant 0 : i32
    %c0_i32_0 = arith.constant 0 : i32
    return %arg0, %c0_i32 : i32, i32
  }
  func.func @transform_1(%arg0: i32) -> (i32, i32) {
    %c0_i32 = arith.constant 0 : i32
    %c0_i32_0 = arith.constant 0 : i32
    %c0_i32_1 = arith.constant 0 : i32
    return %c0_i32, %c0_i32_0 : i32, i32
  }
  func.func @transform_2(%arg0: i32) -> (i32, i32) {
    %c0_i32 = arith.constant 0 : i32
    %c0_i32_0 = arith.constant 0 : i32
    %c0_i32_1 = arith.constant 0 : i32
    return %c0_i32, %c0_i32_0 : i32, i32
  }
  func.func @transform_3(%arg0: i32) -> (i32, i32) {
    %c0_i32 = arith.constant 0 : i32
    %c0_i32_0 = arith.constant 0 : i32
    %c0_i32_1 = arith.constant 0 : i32
    return %c0_i32, %c0_i32_0 : i32, i32
  }
  func.func @transform_4(%arg0: i32) -> (i32, i32) {
    %c0_i32 = arith.constant 0 : i32
    %c0_i32_0 = arith.constant 0 : i32
    %c0_i32_1 = arith.constant 0 : i32
    return %c0_i32, %c0_i32_0 : i32, i32
  }
  func.func @transform_5(%arg0: i32) -> (i32, i32) {
    %c0_i32 = arith.constant 0 : i32
    %c0_i32_0 = arith.constant 0 : i32
    %c0_i32_1 = arith.constant 0 : i32
    return %c0_i32, %c0_i32_0 : i32, i32
  }
  func.func @transform_6(%arg0: i32) -> (i32, i32) {
    %c0_i32 = arith.constant 0 : i32
    %c0_i32_0 = arith.constant 0 : i32
    %c0_i32_1 = arith.constant 0 : i32
    return %c0_i32, %c0_i32_0 : i32, i32
  }
  func.func @transform_7(%arg0: i32) -> (i32, i32) {
    %c0_i32 = arith.constant 0 : i32
    %c0_i32_0 = arith.constant 0 : i32
    return %arg0, %c0_i32 : i32, i32
  }
}

module attributes {stable_mosaic.version = 11 : i64} {
  func.func @_ffn_kernel(%arg0: i32, %arg1: memref<16x128xf32, #tpu.memory_space<vmem>>, %arg2: memref<128x256xbf16, #tpu.memory_space<vmem>>, %arg3: memref<1x256xf32, #tpu.memory_space<vmem>>, %arg4: memref<256x128xbf16, #tpu.memory_space<vmem>>, %arg5: memref<1x128xf32, #tpu.memory_space<vmem>>, %arg6: memref<1x128xf32, #tpu.memory_space<vmem>>, %arg7: memref<1x128xf32, #tpu.memory_space<vmem>>, %arg8: memref<16x128xf32, #tpu.memory_space<vmem>>) attributes {dimension_semantics = [#tpu.dimension_semantics<parallel>], iteration_bounds = array<i64: 1>, scalar_prefetch = 0 : i64, scratch_operands = 0 : i64, tpu.core_type = #tpu.core_type<tc>, window_params = [{transform_indices = @transform_0, window_bounds = array<i64: 16, 128>}, {pipeline_mode = #tpu.pipeline_mode<synchronous>, transform_indices = @transform_1, window_bounds = array<i64: 128, 256>}, {pipeline_mode = #tpu.pipeline_mode<synchronous>, transform_indices = @transform_2, window_bounds = array<i64: 1, 256>}, {pipeline_mode = #tpu.pipeline_mode<synchronous>, transform_indices = @transform_3, window_bounds = array<i64: 256, 128>}, {pipeline_mode = #tpu.pipeline_mode<synchronous>, transform_indices = @transform_4, window_bounds = array<i64: 1, 128>}, {pipeline_mode = #tpu.pipeline_mode<synchronous>, transform_indices = @transform_5, window_bounds = array<i64: 1, 128>}, {pipeline_mode = #tpu.pipeline_mode<synchronous>, transform_indices = @transform_6, window_bounds = array<i64: 1, 128>}, {transform_indices = @transform_7, window_bounds = array<i64: 16, 128>}]} {
    %c0 = arith.constant 0 : index
    %c0_0 = arith.constant 0 : index
    %0 = vector.load %arg1[%c0, %c0_0] : memref<16x128xf32, #tpu.memory_space<vmem>>, vector<16x128xf32>
    %cst = arith.constant dense<0.000000e+00> : vector<16xf32>
    %1 = vector.multi_reduction <add>, %0, %cst [1] : vector<16x128xf32> to vector<16xf32>
    %2 = vector.shape_cast %1 : vector<16xf32> to vector<16x1xf32>
    %3 = arith.mulf %0, %0 : vector<16x128xf32>
    %cst_1 = arith.constant dense<0.000000e+00> : vector<16xf32>
    %4 = vector.multi_reduction <add>, %3, %cst_1 [1] : vector<16x128xf32> to vector<16xf32>
    %5 = vector.shape_cast %4 : vector<16xf32> to vector<16x1xf32>
    %cst_2 = arith.constant 7.812500e-03 : f32
    %6 = vector.broadcast %cst_2 : f32 to vector<16x1xf32>
    %7 = arith.mulf %2, %6 : vector<16x1xf32>
    %cst_3 = arith.constant 7.812500e-03 : f32
    %8 = vector.broadcast %cst_3 : f32 to vector<16x1xf32>
    %9 = arith.mulf %5, %8 : vector<16x1xf32>
    %10 = arith.mulf %7, %7 : vector<16x1xf32>
    %11 = arith.subf %9, %10 : vector<16x1xf32>
    %cst_4 = arith.constant 0.000000e+00 : f32
    %12 = vector.broadcast %cst_4 : f32 to vector<16x1xf32>
    %13 = arith.maximumf %11, %12 : vector<16x1xf32>
    %14 = vector.broadcast %7 : vector<16x1xf32> to vector<16x128xf32>
    %15 = arith.subf %0, %14 : vector<16x128xf32>
    %cst_5 = arith.constant 9.99999997E-7 : f32
    %16 = vector.broadcast %cst_5 : f32 to vector<16x1xf32>
    %17 = arith.addf %13, %16 : vector<16x1xf32>
    %18 = math.rsqrt %17 : vector<16x1xf32>
    %19 = vector.broadcast %18 : vector<16x1xf32> to vector<16x128xf32>
    %20 = arith.mulf %15, %19 : vector<16x128xf32>
    %c0_6 = arith.constant 0 : index
    %c0_7 = arith.constant 0 : index
    %21 = vector.load %arg6[%c0_6, %c0_7] : memref<1x128xf32, #tpu.memory_space<vmem>>, vector<1x128xf32>
    %22 = vector.broadcast %21 : vector<1x128xf32> to vector<16x128xf32>
    %23 = arith.mulf %20, %22 : vector<16x128xf32>
    %c0_8 = arith.constant 0 : index
    %c0_9 = arith.constant 0 : index
    %24 = vector.load %arg7[%c0_8, %c0_9] : memref<1x128xf32, #tpu.memory_space<vmem>>, vector<1x128xf32>
    %25 = vector.broadcast %24 : vector<1x128xf32> to vector<16x128xf32>
    %26 = arith.addf %23, %25 : vector<16x128xf32>
    %27 = arith.truncf %26 : vector<16x128xf32> to vector<16x128xbf16>
    %c0_10 = arith.constant 0 : index
    %c0_11 = arith.constant 0 : index
    %28 = vector.load %arg2[%c0_10, %c0_11] : memref<128x256xbf16, #tpu.memory_space<vmem>>, vector<128x256xbf16>
    %cst_12 = arith.constant dense<0.000000e+00> : vector<16x256xf32>
    %29 = tpu.matmul %27, %28, %cst_12 {dimension_numbers = #tpu.dot_dimension_numbers<[1], [0], [0], [1], [0, 0, 1, 1], [], []>} : vector<16x128xbf16>, vector<128x256xbf16>, vector<16x256xf32> -> vector<16x256xf32>
    %c0_13 = arith.constant 0 : index
    %c0_14 = arith.constant 0 : index
    %30 = vector.load %arg3[%c0_13, %c0_14] : memref<1x256xf32, #tpu.memory_space<vmem>>, vector<1x256xf32>
    %31 = vector.broadcast %30 : vector<1x256xf32> to vector<16x256xf32>
    %32 = arith.addf %29, %31 : vector<16x256xf32>
    %cst_15 = arith.constant 5.000000e-01 : f32
    %33 = vector.broadcast %cst_15 : f32 to vector<16x256xf32>
    %34 = arith.mulf %33, %32 : vector<16x256xf32>
    %cst_16 = arith.constant 0.707106769 : f32
    %35 = vector.broadcast %cst_16 : f32 to vector<16x256xf32>
    %36 = arith.mulf %32, %35 : vector<16x256xf32>
    %37 = math.erf %36 : vector<16x256xf32>
    %cst_17 = arith.constant 1.000000e+00 : f32
    %38 = vector.broadcast %cst_17 : f32 to vector<16x256xf32>
    %39 = arith.addf %38, %37 : vector<16x256xf32>
    %40 = arith.mulf %34, %39 : vector<16x256xf32>
    %41 = arith.truncf %40 : vector<16x256xf32> to vector<16x256xbf16>
    %c0_18 = arith.constant 0 : index
    %c0_19 = arith.constant 0 : index
    %42 = vector.load %arg4[%c0_18, %c0_19] : memref<256x128xbf16, #tpu.memory_space<vmem>>, vector<256x128xbf16>
    %cst_20 = arith.constant dense<0.000000e+00> : vector<16x128xf32>
    %43 = tpu.matmul %41, %42, %cst_20 {dimension_numbers = #tpu.dot_dimension_numbers<[1], [0], [0], [1], [0, 0, 1, 1], [], []>} : vector<16x256xbf16>, vector<256x128xbf16>, vector<16x128xf32> -> vector<16x128xf32>
    %c0_21 = arith.constant 0 : index
    %c0_22 = arith.constant 0 : index
    %44 = vector.load %arg5[%c0_21, %c0_22] : memref<1x128xf32, #tpu.memory_space<vmem>>, vector<1x128xf32>
    %45 = vector.broadcast %44 : vector<1x128xf32> to vector<16x128xf32>
    %46 = arith.addf %43, %45 : vector<16x128xf32>
    %c0_23 = arith.constant 0 : index
    %c0_24 = arith.constant 0 : index
    %47 = vector.load %arg1[%c0_23, %c0_24] : memref<16x128xf32, #tpu.memory_space<vmem>>, vector<16x128xf32>
    %48 = arith.addf %46, %47 : vector<16x128xf32>
    %c0_25 = arith.constant 0 : index
    %c0_26 = arith.constant 0 : index
    %49 = vector.load %arg8[%c0_25, %c0_26] : memref<16x128xf32, #tpu.memory_space<vmem>>, vector<16x128xf32>
    tpu.vector_store %arg8[%c0_25, %c0_26], %48 {strides = array<i32>} : memref<16x128xf32, #tpu.memory_space<vmem>>, vector<16x128xf32>,
    return
  }
  func.func @transform_0(%arg0: i32) -> (i32, i32) {
    %c0_i32 = arith.constant 0 : i32
    %c0_i32_0 = arith.constant 0 : i32
    return %arg0, %c0_i32 : i32, i32
  }
  func.func @transform_1(%arg0: i32) -> (i32, i32) {
    %c0_i32 = arith.constant 0 : i32
    %c0_i32_0 = arith.constant 0 : i32
    %c0_i32_1 = arith.constant 0 : i32
    return %c0_i32, %c0_i32_0 : i32, i32
  }
  func.func @transform_2(%arg0: i32) -> (i32, i32) {
    %c0_i32 = arith.constant 0 : i32
    %c0_i32_0 = arith.constant 0 : i32
    %c0_i32_1 = arith.constant 0 : i32
    return %c0_i32, %c0_i32_0 : i32, i32
  }
  func.func @transform_3(%arg0: i32) -> (i32, i32) {
    %c0_i32 = arith.constant 0 : i32
    %c0_i32_0 = arith.constant 0 : i32
    %c0_i32_1 = arith.constant 0 : i32
    return %c0_i32, %c0_i32_0 : i32, i32
  }
  func.func @transform_4(%arg0: i32) -> (i32, i32) {
    %c0_i32 = arith.constant 0 : i32
    %c0_i32_0 = arith.constant 0 : i32
    %c0_i32_1 = arith.constant 0 : i32
    return %c0_i32, %c0_i32_0 : i32, i32
  }
  func.func @transform_5(%arg0: i32) -> (i32, i32) {
    %c0_i32 = arith.constant 0 : i32
    %c0_i32_0 = arith.constant 0 : i32
    %c0_i32_1 = arith.constant 0 : i32
    return %c0_i32, %c0_i32_0 : i32, i32
  }
  func.func @transform_6(%arg0: i32) -> (i32, i32) {
    %c0_i32 = arith.constant 0 : i32
    %c0_i32_0 = arith.constant 0 : i32
    %c0_i32_1 = arith.constant 0 : i32
    return %c0_i32, %c0_i32_0 : i32, i32
  }
  func.func @transform_7(%arg0: i32) -> (i32, i32) {
    %c0_i32 = arith.constant 0 : i32
    %c0_i32_0 = arith.constant 0 : i32
    return %arg0, %c0_i32 : i32, i32
  }
}

</mosaic_0001>

<llo_original>
// kernel: tpu_custom_call.1
$region0: #{tpu_custom_call.1}
  #allocation0 [shape = 'u32[]', space=smem, size = 0x4, offset = 0x4, fixed_abs, tag = 'smem constant byte address 0x4 - core index']
  #allocation1 [shape = 'u32[144,128]{1,0:T(1,128)}', space=vmem, size = 0x12000, scoped, tag = 'internal scratch']
  %s0 = inlined_call_operand.hbm [shape: f32[16,128], index: 0, kind: input, shape index: {}]
  %s1 = inlined_call_operand.hbm [shape: bf16[128,256], index: 1, kind: input, shape index: {}]
  %s2 = inlined_call_operand.vmem [shape: f32[1,256], index: 2, kind: input, shape index: {}]
  %s3 = inlined_call_operand.hbm [shape: bf16[256,128], index: 3, kind: input, shape index: {}]
  %s4 = inlined_call_operand.vmem [shape: f32[1,128], index: 4, kind: input, shape index: {}]
  %s5 = inlined_call_operand.vmem [shape: f32[1,128], index: 5, kind: input, shape index: {}]
  %s6 = inlined_call_operand.vmem [shape: f32[1,128], index: 6, kind: input, shape index: {}]
  %s7 = inlined_call_operand.hbm [shape: f32[16,128], index: 7, kind: output, shape index: {}]
  %s8 = sld [smem:[#allocation0]]
  $region50: #{tpu_custom_call.1} parent=0
    _
  %s10 = ssub.s32 1, %s8
  %s11 = scalar_select 0, %s10, %s8
  $region1: #{tpu_custom_call.1} parent=0
    #allocation2 [shape = 'u8[8192]{0}', space=vmem, size = 0x2000, scoped, tag = 'input window, operand 0, single buffered']
    #allocation3 [shape = 's32[1]{0}', space=sflag, size = 0x4, scoped, tag = 'scoped memory for tpu_custom_call.1']
    #allocation4 [shape = 's32[1]{0}', space=sflag, size = 0x4, scoped, tag = 'scoped memory for tpu_custom_call.1']
    #allocation5 [shape = 'u8[65536]{0}', space=vmem, size = 0x10000, scoped, tag = 'input window, operand 1, single buffered']
    #allocation6 [shape = 's32[1]{0}', space=sflag, size = 0x4, scoped, tag = 'scoped memory for tpu_custom_call.1']
    #allocation7 [shape = 'u8[65536]{0}', space=vmem, size = 0x10000, scoped, tag = 'input window, operand 3, single buffered']
    #allocation8 [shape = 'u8[8192]{0}', space=vmem, size = 0x2000, scoped, tag = 'output window, operand 0, single buffered']
    %12 = vsyncpa [#allocation3], 0
    %13 = vsyncpa [#allocation6], 0
    %14 = vsyncpa [#allocation4], 0
    // Predicated region
    $region2: #{tpu_custom_call.1} parent=1 // pred_check
      _
    $region3: #{tpu_custom_call.1} parent=1 // pred_check_branch
      %16 = sbr.rel (0) target = $region5
    $region4: #{tpu_custom_call.1} parent=1 // pred_region
      %s18 = ssub.s32 256, 256
      %19 = vsyncadd [#allocation3], %s18
      %s20 = sshll.u32 [#allocation2], 4
      %s21 = int_to_ptr.vmem [resolvable:$true] %s20
      %26 = dma.hbm_to_vmem [thread:$0]  %s0, 256, %s21, [#allocation3], 128, 128, 8
    $region5: #{tpu_custom_call.1} parent=1 // pred_fallthru
      _
    // Predicated region
    $region6: #{tpu_custom_call.1} parent=1 // pred_check
      _
    $region7: #{tpu_custom_call.1} parent=1 // pred_check_branch
      %28 = sbr.rel (0) target = $region9
    $region8: #{tpu_custom_call.1} parent=1 // pred_region
      %s30 = ssub.s32 2048, 2048
      %31 = vsyncadd [#allocation6], %s30
      %s32 = sshll.u32 [#allocation5], 4
      %s33 = int_to_ptr.vmem [resolvable:$true] %s32
      %38 = dma.hbm_to_vmem [thread:$0]  %s1, 2048, %s33, [#allocation6], 128, 128, 8
    $region9: #{tpu_custom_call.1} parent=1 // pred_fallthru
      _
    // Predicated region
    $region10: #{tpu_custom_call.1} parent=1 // pred_check
      _
    $region11: #{tpu_custom_call.1} parent=1 // pred_check_branch
      %40 = sbr.rel (0) target = $region13
    $region12: #{tpu_custom_call.1} parent=1 // pred_region
      _
    $region13: #{tpu_custom_call.1} parent=1 // pred_fallthru
      _
    // Predicated region
    $region14: #{tpu_custom_call.1} parent=1 // pred_check
      _
    $region15: #{tpu_custom_call.1} parent=1 // pred_check_branch
      %42 = sbr.rel (0) target = $region17
    $region16: #{tpu_custom_call.1} parent=1 // pred_region
      %s44 = ssub.s32 2048, 2048
      %45 = vsyncadd [#allocation6], %s44
      %s46 = sshll.u32 [#allocation7], 4
      %s47 = int_to_ptr.vmem [resolvable:$true] %s46
      %52 = dma.hbm_to_vmem [thread:$0]  %s3, 2048, %s47, [#allocation6], 64, 64, 4
    $region17: #{tpu_custom_call.1} parent=1 // pred_fallthru
      _
    // Predicated region
    $region18: #{tpu_custom_call.1} parent=1 // pred_check
      _
    $region19: #{tpu_custom_call.1} parent=1 // pred_check_branch
      %54 = sbr.rel (0) target = $region21
    $region20: #{tpu_custom_call.1} parent=1 // pred_region
      _
    $region21: #{tpu_custom_call.1} parent=1 // pred_fallthru
      _
    // Predicated region
    $region22: #{tpu_custom_call.1} parent=1 // pred_check
      _
    $region23: #{tpu_custom_call.1} parent=1 // pred_check_branch
      %56 = sbr.rel (0) target = $region25
    $region24: #{tpu_custom_call.1} parent=1 // pred_region
      _
    $region25: #{tpu_custom_call.1} parent=1 // pred_fallthru
      _
    // Predicated region
    $region26: #{tpu_custom_call.1} parent=1 // pred_check
      _
    $region27: #{tpu_custom_call.1} parent=1 // pred_check_branch
      %58 = sbr.rel (0) target = $region29
    $region28: #{tpu_custom_call.1} parent=1 // pred_region
      _
    $region29: #{tpu_custom_call.1} parent=1 // pred_fallthru
      _
    // Predicated region
    $region30: #{tpu_custom_call.1} parent=1 // pred_check
      _
    $region31: #{tpu_custom_call.1} parent=1 // pred_check_branch
      %60 = sbr.rel (0) target = $region33
    $region32: #{tpu_custom_call.1} parent=1 // pred_region
      %61 = dma.done [#allocation3], 256
    $region33: #{tpu_custom_call.1} parent=1 // pred_fallthru
      _
    // Predicated region
    $region34: #{tpu_custom_call.1} parent=1 // pred_check
      _
    $region35: #{tpu_custom_call.1} parent=1 // pred_check_branch
      %63 = sbr.rel (0) target = $region37
    $region36: #{tpu_custom_call.1} parent=1 // pred_region
      %64 = dma.done [#allocation6], 2048
    $region37: #{tpu_custom_call.1} parent=1 // pred_fallthru
      _
    // Predicated region
    $region38: #{tpu_custom_call.1} parent=1 // pred_check
      _
    $region39: #{tpu_custom_call.1} parent=1 // pred_check_branch
      %66 = sbr.rel (0) target = $region41
    $region40: #{tpu_custom_call.1} parent=1 // pred_region
      %67 = dma.done [#allocation6], 2048
    $region41: #{tpu_custom_call.1} parent=1 // pred_fallthru
      _
    %v69 = vld [vmem:[#allocation2] sm:$0xff]
    %v70 = vld [vmem:[#allocation2 + $0x8] sm:$0xff]
    %71 = vadd.xlane.f32.xlu0 %v69
    %v72 = vpop.xlane.xlu0 %71
    %73 = vadd.xlane.f32.xlu0 %v70
    %v74 = vpop.xlane.xlu0 %73
    %v75 = vmul.f32 %v69, %v69
    %v76 = vmul.f32 %v70, %v70
    %77 = vadd.xlane.f32.xlu0 %v75
    %v78 = vpop.xlane.xlu0 %77
    %79 = vadd.xlane.f32.xlu0 %v76
    %v80 = vpop.xlane.xlu0 %79
    %v81 = vmul.f32 %v72, 0.0078125
    %v82 = vmul.f32 %v74, 0.0078125
    %v83 = vmul.f32 %v78, 0.0078125
    %v84 = vmul.f32 %v80, 0.0078125
    %v85 = vmul.f32 %v81, %v81
    %v86 = vmul.f32 %v82, %v82
    %v87 = vsub.f32 %v83, %v85
    %v88 = vsub.f32 %v84, %v86
    %v89 = vmax.f32 %v87, 0.0
    %v90 = vmax.f32 %v88, 0.0
    %v91 = vsub.f32 %v69, %v81
    %v92 = vsub.f32 %v70, %v82
    %v93 = vadd.f32 %v89, 1e-06
    %v94 = vadd.f32 %v90, 1e-06
    %v95 = vrsqrt.pop %v93
    %v96 = vrsqrt.pop %v94
    %v97 = vmul.f32 %v91, %v95
    %v98 = vmul.f32 %v92, %v96
    %v99 = vld [vmem:[%s5] sm:$0x1]
    %v101 = vlaneseq
    %v102 = vshrl.u32 %v101, 7
    %v103 = vsub.s32 0, %v102
    %v104 = vrot.slane %v99, %v103
    %v106 = vmul.f32 %v97, %v104
    %v107 = vmul.f32 %v98, %v104
    %v108 = vld [vmem:[%s6] sm:$0x1]
    %v110 = vlaneseq
    %v111 = vshrl.u32 %v110, 7
    %v112 = vsub.s32 0, %v111
    %v113 = vrot.slane %v108, %v112
    %v115 = vadd.f32 %v106, %v113
    %v116 = vadd.f32 %v107, %v113
    %v117 = vpack.c.bf16 %v116, %v115
    %v118 = vld [vmem:[#allocation5] sm:$0xff]
    %v119 = vld [vmem:[#allocation5 + $0x8] sm:$0xff]
    %v120 = vld [vmem:[#allocation5 + $0x10] sm:$0xff]
    %v121 = vld [vmem:[#allocation5 + $0x18] sm:$0xff]
    %v122 = vld [vmem:[#allocation5 + $0x20] sm:$0xff]
    %v123 = vld [vmem:[#allocation5 + $0x28] sm:$0xff]
    %v124 = vld [vmem:[#allocation5 + $0x30] sm:$0xff]
    %v125 = vld [vmem:[#allocation5 + $0x38] sm:$0xff]
    %v126 = vld [vmem:[#allocation5 + $0x40] sm:$0xff]
    %v127 = vld [vmem:[#allocation5 + $0x48] sm:$0xff]
    %v128 = vld [vmem:[#allocation5 + $0x50] sm:$0xff]
    %v129 = vld [vmem:[#allocation5 + $0x58] sm:$0xff]
    %v130 = vld [vmem:[#allocation5 + $0x60] sm:$0xff]
    %v131 = vld [vmem:[#allocation5 + $0x68] sm:$0xff]
    %v132 = vld [vmem:[#allocation5 + $0x70] sm:$0xff]
    %v133 = vld [vmem:[#allocation5 + $0x78] sm:$0xff]
    %v134 = vld [vmem:[%s2] sm:$0x3]
    %v136 = vlaneseq
    %v137 = vshrl.u32 %v136, 7
    %v138 = vsub.s32 0, %v137
    %v139 = vrot.slane %v134, %v138
    %v140 = vlaneseq
    %v141 = vshrl.u32 %v140, 7
    %v142 = vsub.s32 1, %v141
    %v143 = vrot.slane %v134, %v142
    %v162 = vunpack.c.l.b16 %v118
    %v163 = vunpack.c.h.b16 %v118
    %v164 = vunpack.c.l.b16 %v119
    %v165 = vunpack.c.h.b16 %v119
    %v166 = vunpack.c.l.b16 %v120
    %v167 = vunpack.c.h.b16 %v120
    %v168 = vunpack.c.l.b16 %v121
    %v169 = vunpack.c.h.b16 %v121
    %v170 = vunpack.c.l.b16 %v122
    %v171 = vunpack.c.h.b16 %v122
    %v172 = vunpack.c.l.b16 %v123
    %v173 = vunpack.c.h.b16 %v123
    %v174 = vunpack.c.l.b16 %v124
    %v175 = vunpack.c.h.b16 %v124
    %v176 = vunpack.c.l.b16 %v125
    %v177 = vunpack.c.h.b16 %v125
    %v178 = vunpack.c.l.b16 %v126
    %v179 = vunpack.c.h.b16 %v126
    %v180 = vunpack.c.l.b16 %v127
    %v181 = vunpack.c.h.b16 %v127
    %v182 = vunpack.c.l.b16 %v128
    %v183 = vunpack.c.h.b16 %v128
    %v184 = vunpack.c.l.b16 %v129
    %v185 = vunpack.c.h.b16 %v129
    %v186 = vunpack.c.l.b16 %v130
    %v187 = vunpack.c.h.b16 %v130
    %v188 = vunpack.c.l.b16 %v131
    %v189 = vunpack.c.h.b16 %v131
    %v190 = vunpack.c.l.b16 %v132
    %v191 = vunpack.c.h.b16 %v132
    %v192 = vunpack.c.l.b16 %v133
    %v193 = vunpack.c.h.b16 %v133
    %v194 = vpack.c.b16 %v164, %v162
    %v195 = vpack.c.b16 %v165, %v163
    %v196 = vpack.c.b16 %v168, %v166
    %v197 = vpack.c.b16 %v169, %v167
    %v198 = vpack.c.b16 %v172, %v170
    %v199 = vpack.c.b16 %v173, %v171
    %v200 = vpack.c.b16 %v176, %v174
    %v201 = vpack.c.b16 %v177, %v175
    %v202 = vpack.c.b16 %v180, %v178
    %v203 = vpack.c.b16 %v181, %v179
    %v204 = vpack.c.b16 %v184, %v182
    %v205 = vpack.c.b16 %v185, %v183
    %v206 = vpack.c.b16 %v188, %v186
    %v207 = vpack.c.b16 %v189, %v187
    %v208 = vpack.c.b16 %v192, %v190
    %v209 = vpack.c.b16 %v193, %v191
    %226 = vmatprep.subr.bf16.mxu0 %v195
    %227 = vmatpush1.bf16.msra.mxu0 %v194
    %228 = vmatprep.subr.bf16.mxu0 %v197
    %229 = vmatpush1.bf16.msra.mxu0 %v196
    %230 = vmatprep.subr.bf16.mxu0 %v199
    %231 = vmatpush1.bf16.msra.mxu0 %v198
    %232 = vmatprep.subr.bf16.mxu0 %v201
    %233 = vmatpush1.bf16.msra.mxu0 %v200
    %234 = vmatprep.subr.bf16.mxu0 %v203
    %235 = vmatpush1.bf16.msra.mxu0 %v202
    %236 = vmatprep.subr.bf16.mxu0 %v205
    %237 = vmatpush1.bf16.msra.mxu0 %v204
    %238 = vmatprep.subr.bf16.mxu0 %v207
    %239 = vmatpush1.bf16.msra.mxu0 %v206
    %240 = vmatprep.subr.bf16.mxu0 %v209
    %241 = vmatpush1.bf16.msra.mxu0 %v208
    %242 = vmatprep.subr.bf16.mxu0 0
    %243 = vmatpush1.bf16.msra.mxu0 0
    %244 = vmatprep.subr.bf16.mxu0 0
    %245 = vmatpush1.bf16.msra.mxu0 0
    %246 = vmatprep.subr.bf16.mxu0 0
    %247 = vmatpush1.bf16.msra.mxu0 0
    %248 = vmatprep.subr.bf16.mxu0 0
    %249 = vmatpush1.bf16.msra.mxu0 0
    %250 = vmatprep.subr.bf16.mxu0 0
    %251 = vmatpush1.bf16.msra.mxu0 0
    %252 = vmatprep.subr.bf16.mxu0 0
    %253 = vmatpush1.bf16.msra.mxu0 0
    %254 = vmatprep.subr.bf16.mxu0 0
    %255 = vmatpush1.bf16.msra.mxu0 0
    %256 = vmatprep.subr.bf16.mxu0 0
    %257 = vmatpush1.bf16.msra.mxu0 0
    %258 = vmatprep.mubr.bf16.mxu0 0
    %259 = vmatmul.mubr.bf16.gmra.mrb[0].mxu0 %v117
    %v260 = vpop.f32.mrb[0].mxu0
    %v261 = vadd.f32 %v139, %v260
    %v262 = vpop.f32.mrb[0].mxu0
    %v263 = vadd.f32 %v143, %v262
    %v264 = vpop.f32.mrb[0].mxu0
    %v265 = vadd.f32 %v139, %v264
    %v266 = vpop.f32.mrb[0].mxu0
    %v267 = vadd.f32 %v143, %v266
    %268 = vdwg.mxu0
    %v269 = vmul.f32 %v261, 0.5
    %v270 = vmul.f32 %v263, 0.5
    %v271 = vmul.f32 %v265, 0.5
    %v272 = vmul.f32 %v267, 0.5
    %v273 = vmul.f32 %v261, 0.70710677
    %v274 = vmul.f32 %v263, 0.70710677
    %v275 = vmul.f32 %v265, 0.70710677
    %v276 = vmul.f32 %v267, 0.70710677
    %v277 = verf.f32.pop %v273
    %v278 = verf.f32.pop %v274
    %v279 = verf.f32.pop %v275
    %v280 = verf.f32.pop %v276
    %v281 = vadd.f32 %v277, 1.0
    %v282 = vadd.f32 %v278, 1.0
    %v283 = vadd.f32 %v279, 1.0
    %v284 = vadd.f32 %v280, 1.0
    %v285 = vmul.f32 %v269, %v281
    %v286 = vmul.f32 %v270, %v282
    %v287 = vmul.f32 %v271, %v283
    %v288 = vmul.f32 %v272, %v284
    %v289 = vpack.c.bf16 %v287, %v285
    %v290 = vpack.c.bf16 %v288, %v286
    %v291 = vld [vmem:[#allocation7] sm:$0xf]
    %v292 = vld [vmem:[#allocation7 + $0x4] sm:$0xf]
    %v293 = vld [vmem:[#allocation7 + $0x8] sm:$0xf]
    %v294 = vld [vmem:[#allocation7 + $0xc] sm:$0xf]
    %v295 = vld [vmem:[#allocation7 + $0x10] sm:$0xf]
    %v296 = vld [vmem:[#allocation7 + $0x14] sm:$0xf]
    %v297 = vld [vmem:[#allocation7 + $0x18] sm:$0xf]
    %v298 = vld [vmem:[#allocation7 + $0x1c] sm:$0xf]
    %v299 = vld [vmem:[#allocation7 + $0x20] sm:$0xf]
    %v300 = vld [vmem:[#allocation7 + $0x24] sm:$0xf]
    %v301 = vld [vmem:[#allocation7 + $0x28] sm:$0xf]
    %v302 = vld [vmem:[#allocation7 + $0x2c] sm:$0xf]
    %v303 = vld [vmem:[#allocation7 + $0x30] sm:$0xf]
    %v304 = vld [vmem:[#allocation7 + $0x34] sm:$0xf]
    %v305 = vld [vmem:[#allocation7 + $0x38] sm:$0xf]
    %v306 = vld [vmem:[#allocation7 + $0x3c] sm:$0xf]
    %v307 = vld [vmem:[#allocation7 + $0x40] sm:$0xf]
    %v308 = vld [vmem:[#allocation7 + $0x44] sm:$0xf]
    %v309 = vld [vmem:[#allocation7 + $0x48] sm:$0xf]
    %v310 = vld [vmem:[#allocation7 + $0x4c] sm:$0xf]
    %v311 = vld [vmem:[#allocation7 + $0x50] sm:$0xf]
    %v312 = vld [vmem:[#allocation7 + $0x54] sm:$0xf]
    %v313 = vld [vmem:[#allocation7 + $0x58] sm:$0xf]
    %v314 = vld [vmem:[#allocation7 + $0x5c] sm:$0xf]
    %v315 = vld [vmem:[#allocation7 + $0x60] sm:$0xf]
    %v316 = vld [vmem:[#allocation7 + $0x64] sm:$0xf]
    %v317 = vld [vmem:[#allocation7 + $0x68] sm:$0xf]
    %v318 = vld [vmem:[#allocation7 + $0x6c] sm:$0xf]
    %v319 = vld [vmem:[#allocation7 + $0x70] sm:$0xf]
    %v320 = vld [vmem:[#allocation7 + $0x74] sm:$0xf]
    %v321 = vld [vmem:[#allocation7 + $0x78] sm:$0xf]
    %v322 = vld [vmem:[#allocation7 + $0x7c] sm:$0xf]
    %v323 = vld [vmem:[%s4] sm:$0x1]
    %v325 = vlaneseq
    %v326 = vshrl.u32 %v325, 7
    %v327 = vsub.s32 0, %v326
    %v328 = vrot.slane %v323, %v327
    %v362 = vunpack.c.l.b16 %v291
    %v363 = vunpack.c.l.b16 %v292
    %v364 = vunpack.c.l.b16 %v293
    %v365 = vunpack.c.l.b16 %v294
    %v366 = vunpack.c.l.b16 %v295
    %v367 = vunpack.c.l.b16 %v296
    %v368 = vunpack.c.l.b16 %v297
    %v369 = vunpack.c.l.b16 %v298
    %v370 = vunpack.c.l.b16 %v299
    %v371 = vunpack.c.l.b16 %v300
    %v372 = vunpack.c.l.b16 %v301
    %v373 = vunpack.c.l.b16 %v302
    %v374 = vunpack.c.l.b16 %v303
    %v375 = vunpack.c.l.b16 %v304
    %v376 = vunpack.c.l.b16 %v305
    %v377 = vunpack.c.l.b16 %v306
    %v378 = vunpack.c.l.b16 %v307
    %v379 = vunpack.c.l.b16 %v308
    %v380 = vunpack.c.l.b16 %v309
    %v381 = vunpack.c.l.b16 %v310
    %v382 = vunpack.c.l.b16 %v311
    %v383 = vunpack.c.l.b16 %v312
    %v384 = vunpack.c.l.b16 %v313
    %v385 = vunpack.c.l.b16 %v314
    %v386 = vunpack.c.l.b16 %v315
    %v387 = vunpack.c.l.b16 %v316
    %v388 = vunpack.c.l.b16 %v317
    %v389 = vunpack.c.l.b16 %v318
    %v390 = vunpack.c.l.b16 %v319
    %v391 = vunpack.c.l.b16 %v320
    %v392 = vunpack.c.l.b16 %v321
    %v393 = vunpack.c.l.b16 %v322
    %v394 = vpack.c.b16 %v363, %v362
    %v395 = vpack.c.b16 %v365, %v364
    %v396 = vpack.c.b16 %v367, %v366
    %v397 = vpack.c.b16 %v369, %v368
    %v398 = vpack.c.b16 %v371, %v370
    %v399 = vpack.c.b16 %v373, %v372
    %v400 = vpack.c.b16 %v375, %v374
    %v401 = vpack.c.b16 %v377, %v376
    %v402 = vpack.c.b16 %v379, %v378
    %v403 = vpack.c.b16 %v381, %v380
    %v404 = vpack.c.b16 %v383, %v382
    %v405 = vpack.c.b16 %v385, %v384
    %v406 = vpack.c.b16 %v387, %v386
    %v407 = vpack.c.b16 %v389, %v388
    %v408 = vpack.c.b16 %v391, %v390
    %v409 = vpack.c.b16 %v393, %v392
    %426 = vmatprep.subr.bf16.mxu0 0
    %427 = vmatpush1.bf16.msra.mxu0 %v394
    %428 = vmatprep.subr.bf16.mxu0 0
    %429 = vmatpush1.bf16.msra.mxu0 %v395
    %430 = vmatprep.subr.bf16.mxu0 0
    %431 = vmatpush1.bf16.msra.mxu0 %v396
    %432 = vmatprep.subr.bf16.mxu0 0
    %433 = vmatpush1.bf16.msra.mxu0 %v397
    %434 = vmatprep.subr.bf16.mxu0 0
    %435 = vmatpush1.bf16.msra.mxu0 %v398
    %436 = vmatprep.subr.bf16.mxu0 0
    %437 = vmatpush1.bf16.msra.mxu0 %v399
    %438 = vmatprep.subr.bf16.mxu0 0
    %439 = vmatpush1.bf16.msra.mxu0 %v400
    %440 = vmatprep.subr.bf16.mxu0 0
    %441 = vmatpush1.bf16.msra.mxu0 %v401
    %442 = vmatprep.subr.bf16.mxu0 0
    %443 = vmatpush1.bf16.msra.mxu0 %v402
    %444 = vmatprep.subr.bf16.mxu0 0
    %445 = vmatpush1.bf16.msra.mxu0 %v403
    %446 = vmatprep.subr.bf16.mxu0 0
    %447 = vmatpush1.bf16.msra.mxu0 %v404
    %448 = vmatprep.subr.bf16.mxu0 0
    %449 = vmatpush1.bf16.msra.mxu0 %v405
    %450 = vmatprep.subr.bf16.mxu0 0
    %451 = vmatpush1.bf16.msra.mxu0 %v406
    %452 = vmatprep.subr.bf16.mxu0 0
    %453 = vmatpush1.bf16.msra.mxu0 %v407
    %454 = vmatprep.subr.bf16.mxu0 0
    %455 = vmatpush1.bf16.msra.mxu0 %v408
    %456 = vmatprep.subr.bf16.mxu0 0
    %457 = vmatpush1.bf16.msra.mxu0 %v409
    %458 = vmatprep.mubr.bf16.mxu0 %v290
    %459 = vmatmul.mubr.bf16.gmra.mrb[0].mxu0 %v289
    %v460 = vpop.f32.mrb[0].mxu0
    %v461 = vadd.f32 %v328, %v460
    %v462 = vpop.f32.mrb[0].mxu0
    %v463 = vpop.f32.mrb[0].mxu0
    %v464 = vadd.f32 %v328, %v463
    %v465 = vpop.f32.mrb[0].mxu0
    %466 = vdwg.mxu0
    %v467 = vadd.f32 %v461, %v69
    %v468 = vadd.f32 %v464, %v70
    %469 = vst [vmem:[#allocation8] sm:$0xff] %v467
    %470 = vst [vmem:[#allocation8 + $0x8] sm:$0xff] %v468
    // Predicated region
    $region42: #{tpu_custom_call.1} parent=1 // pred_check
      _
    $region43: #{tpu_custom_call.1} parent=1 // pred_check_branch
      %472 = sbr.rel (0) target = $region45
    $region44: #{tpu_custom_call.1} parent=1 // pred_region
      %s474 = ssub.s32 256, 256
      %475 = vsyncadd [#allocation4], %s474
      %s476 = sshll.u32 [#allocation8], 4
      %s477 = int_to_ptr.vmem [resolvable:$true] %s476
      %482 = dma.vmem_to_hbm [thread:$0]  %s477, 256, %s7, [#allocation4], 128, 128, 8
    $region45: #{tpu_custom_call.1} parent=1 // pred_fallthru
      _
    // Predicated region
    $region46: #{tpu_custom_call.1} parent=1 // pred_check
      _
    $region47: #{tpu_custom_call.1} parent=1 // pred_check_branch
      %484 = sbr.rel (0) target = $region49
    $region48: #{tpu_custom_call.1} parent=1 // pred_region
      %485 = dma.done [#allocation4], 256
    $region49: #{tpu_custom_call.1} parent=1 // pred_fallthru
      _
    %486 = vsyncpa [#allocation3], 1
    %487 = vsyncpa [#allocation6], 1
    %488 = vsyncpa [#allocation4], 1

// kernel: tpu_custom_call.1
$region0: #{tpu_custom_call.1}
  #allocation0 [shape = 'u32[]', space=smem, size = 0x4, offset = 0x4, fixed_abs, tag = 'smem constant byte address 0x4 - core index']
  #allocation1 [shape = 'u32[144,128]{1,0:T(1,128)}', space=vmem, size = 0x12000, scoped, tag = 'internal scratch']
  %s0 = inlined_call_operand.hbm [shape: f32[16,128], index: 0, kind: input, shape index: {}]
  %s1 = inlined_call_operand.hbm [shape: bf16[128,256], index: 1, kind: input, shape index: {}]
  %s2 = inlined_call_operand.vmem [shape: f32[1,256], index: 2, kind: input, shape index: {}]
  %s3 = inlined_call_operand.hbm [shape: bf16[256,128], index: 3, kind: input, shape index: {}]
  %s4 = inlined_call_operand.vmem [shape: f32[1,128], index: 4, kind: input, shape index: {}]
  %s5 = inlined_call_operand.vmem [shape: f32[1,128], index: 5, kind: input, shape index: {}]
  %s6 = inlined_call_operand.vmem [shape: f32[1,128], index: 6, kind: input, shape index: {}]
  %s7 = inlined_call_operand.hbm [shape: f32[16,128], index: 7, kind: output, shape index: {}]
  %s8 = sld [smem:[#allocation0]]
  $region50: #{tpu_custom_call.1} parent=0
    _
  %s10 = ssub.s32 1, %s8
  %s11 = scalar_select 0, %s10, %s8
  $region1: #{tpu_custom_call.1} parent=0
    #allocation2 [shape = 'u8[8192]{0}', space=vmem, size = 0x2000, scoped, tag = 'input window, operand 0, single buffered']
    #allocation3 [shape = 's32[1]{0}', space=sflag, size = 0x4, scoped, tag = 'scoped memory for tpu_custom_call.1']
    #allocation4 [shape = 's32[1]{0}', space=sflag, size = 0x4, scoped, tag = 'scoped memory for tpu_custom_call.1']
    #allocation5 [shape = 'u8[65536]{0}', space=vmem, size = 0x10000, scoped, tag = 'input window, operand 1, single buffered']
    #allocation6 [shape = 's32[1]{0}', space=sflag, size = 0x4, scoped, tag = 'scoped memory for tpu_custom_call.1']
    #allocation7 [shape = 'u8[65536]{0}', space=vmem, size = 0x10000, scoped, tag = 'input window, operand 3, single buffered']
    #allocation8 [shape = 'u8[8192]{0}', space=vmem, size = 0x2000, scoped, tag = 'output window, operand 0, single buffered']
    %12 = vsyncpa [#allocation3], 0
    %13 = vsyncpa [#allocation6], 0
    %14 = vsyncpa [#allocation4], 0
    // Predicated region
    $region2: #{tpu_custom_call.1} parent=1 // pred_check
      _
    $region3: #{tpu_custom_call.1} parent=1 // pred_check_branch
      %16 = sbr.rel (0) target = $region5
    $region4: #{tpu_custom_call.1} parent=1 // pred_region
      %s18 = ssub.s32 256, 256
      %19 = vsyncadd [#allocation3], %s18
      %s20 = sshll.u32 [#allocation2], 4
      %s21 = int_to_ptr.vmem [resolvable:$true] %s20
      %26 = dma.hbm_to_vmem [thread:$0]  %s0, 256, %s21, [#allocation3], 128, 128, 8
    $region5: #{tpu_custom_call.1} parent=1 // pred_fallthru
      _
    // Predicated region
    $region6: #{tpu_custom_call.1} parent=1 // pred_check
      _
    $region7: #{tpu_custom_call.1} parent=1 // pred_check_branch
      %28 = sbr.rel (0) target = $region9
    $region8: #{tpu_custom_call.1} parent=1 // pred_region
      %s30 = ssub.s32 2048, 2048
      %31 = vsyncadd [#allocation6], %s30
      %s32 = sshll.u32 [#allocation5], 4
      %s33 = int_to_ptr.vmem [resolvable:$true] %s32
      %38 = dma.hbm_to_vmem [thread:$0]  %s1, 2048, %s33, [#allocation6], 128, 128, 8
    $region9: #{tpu_custom_call.1} parent=1 // pred_fallthru
      _
    // Predicated region
    $region10: #{tpu_custom_call.1} parent=1 // pred_check
      _
    $region11: #{tpu_custom_call.1} parent=1 // pred_check_branch
      %40 = sbr.rel (0) target = $region13
    $region12: #{tpu_custom_call.1} parent=1 // pred_region
      _
    $region13: #{tpu_custom_call.1} parent=1 // pred_fallthru
      _
    // Predicated region
    $region14: #{tpu_custom_call.1} parent=1 // pred_check
      _
    $region15: #{tpu_custom_call.1} parent=1 // pred_check_branch
      %42 = sbr.rel (0) target = $region17
    $region16: #{tpu_custom_call.1} parent=1 // pred_region
      %s44 = ssub.s32 2048, 2048
      %45 = vsyncadd [#allocation6], %s44
      %s46 = sshll.u32 [#allocation7], 4
      %s47 = int_to_ptr.vmem [resolvable:$true] %s46
      %52 = dma.hbm_to_vmem [thread:$0]  %s3, 2048, %s47, [#allocation6], 64, 64, 4
    $region17: #{tpu_custom_call.1} parent=1 // pred_fallthru
      _
    // Predicated region
    $region18: #{tpu_custom_call.1} parent=1 // pred_check
      _
    $region19: #{tpu_custom_call.1} parent=1 // pred_check_branch
      %54 = sbr.rel (0) target = $region21
    $region20: #{tpu_custom_call.1} parent=1 // pred_region
      _
    $region21: #{tpu_custom_call.1} parent=1 // pred_fallthru
      _
    // Predicated region
    $region22: #{tpu_custom_call.1} parent=1 // pred_check
      _
    $region23: #{tpu_custom_call.1} parent=1 // pred_check_branch
      %56 = sbr.rel (0) target = $region25
    $region24: #{tpu_custom_call.1} parent=1 // pred_region
      _
    $region25: #{tpu_custom_call.1} parent=1 // pred_fallthru
      _
    // Predicated region
    $region26: #{tpu_custom_call.1} parent=1 // pred_check
      _
    $region27: #{tpu_custom_call.1} parent=1 // pred_check_branch
      %58 = sbr.rel (0) target = $region29
    $region28: #{tpu_custom_call.1} parent=1 // pred_region
      _
    $region29: #{tpu_custom_call.1} parent=1 // pred_fallthru
      _
    // Predicated region
    $region30: #{tpu_custom_call.1} parent=1 // pred_check
      _
    $region31: #{tpu_custom_call.1} parent=1 // pred_check_branch
      %60 = sbr.rel (0) target = $region33
    $region32: #{tpu_custom_call.1} parent=1 // pred_region
      %61 = dma.done [#allocation3], 256
    $region33: #{tpu_custom_call.1} parent=1 // pred_fallthru
      _
    // Predicated region
    $region34: #{tpu_custom_call.1} parent=1 // pred_check
      _
    $region35: #{tpu_custom_call.1} parent=1 // pred_check_branch
      %63 = sbr.rel (0) target = $region37
    $region36: #{tpu_custom_call.1} parent=1 // pred_region
      %64 = dma.done [#allocation6], 2048
    $region37: #{tpu_custom_call.1} parent=1 // pred_fallthru
      _
    // Predicated region
    $region38: #{tpu_custom_call.1} parent=1 // pred_check
      _
    $region39: #{tpu_custom_call.1} parent=1 // pred_check_branch
      %66 = sbr.rel (0) target = $region41
    $region40: #{tpu_custom_call.1} parent=1 // pred_region
      %67 = dma.done [#allocation6], 2048
    $region41: #{tpu_custom_call.1} parent=1 // pred_fallthru
      _
    %v69 = vld [vmem:[#allocation2] sm:$0xff]
    %v70 = vld [vmem:[#allocation2 + $0x8] sm:$0xff]
    %71 = vadd.xlane.f32.xlu0 %v69
    %v72 = vpop.xlane.xlu0 %71
    %73 = vadd.xlane.f32.xlu0 %v70
    %v74 = vpop.xlane.xlu0 %73
    %v75 = vmul.f32 %v69, %v69
    %v76 = vmul.f32 %v70, %v70
    %77 = vadd.xlane.f32.xlu0 %v75
    %v78 = vpop.xlane.xlu0 %77
    %79 = vadd.xlane.f32.xlu0 %v76
    %v80 = vpop.xlane.xlu0 %79
    %v81 = vmul.f32 %v72, 0.0078125
    %v82 = vmul.f32 %v74, 0.0078125
    %v83 = vmul.f32 %v78, 0.0078125
    %v84 = vmul.f32 %v80, 0.0078125
    %v85 = vmul.f32 %v81, %v81
    %v86 = vmul.f32 %v82, %v82
    %v87 = vsub.f32 %v83, %v85
    %v88 = vsub.f32 %v84, %v86
    %v89 = vmax.f32 %v87, 0.0
    %v90 = vmax.f32 %v88, 0.0
    %v91 = vsub.f32 %v69, %v81
    %v92 = vsub.f32 %v70, %v82
    %v93 = vadd.f32 %v89, 1e-06
    %v94 = vadd.f32 %v90, 1e-06
    %v95 = vrsqrt.pop %v93
    %v96 = vrsqrt.pop %v94
    %v97 = vmul.f32 %v91, %v95
    %v98 = vmul.f32 %v92, %v96
    %v99 = vld [vmem:[%s5] sm:$0x1]
    %v101 = vlaneseq
    %v102 = vshrl.u32 %v101, 7
    %v103 = vsub.s32 0, %v102
    %v104 = vrot.slane %v99, %v103
    %v106 = vmul.f32 %v97, %v104
    %v107 = vmul.f32 %v98, %v104
    %v108 = vld [vmem:[%s6] sm:$0x1]
    %v110 = vlaneseq
    %v111 = vshrl.u32 %v110, 7
    %v112 = vsub.s32 0, %v111
    %v113 = vrot.slane %v108, %v112
    %v115 = vadd.f32 %v106, %v113
    %v116 = vadd.f32 %v107, %v113
    %v117 = vpack.c.bf16 %v116, %v115
    %v118 = vld [vmem:[#allocation5] sm:$0xff]
    %v119 = vld [vmem:[#allocation5 + $0x8] sm:$0xff]
    %v120 = vld [vmem:[#allocation5 + $0x10] sm:$0xff]
    %v121 = vld [vmem:[#allocation5 + $0x18] sm:$0xff]
    %v122 = vld [vmem:[#allocation5 + $0x20] sm:$0xff]
    %v123 = vld [vmem:[#allocation5 + $0x28] sm:$0xff]
    %v124 = vld [vmem:[#allocation5 + $0x30] sm:$0xff]
    %v125 = vld [vmem:[#allocation5 + $0x38] sm:$0xff]
    %v126 = vld [vmem:[#allocation5 + $0x40] sm:$0xff]
    %v127 = vld [vmem:[#allocation5 + $0x48] sm:$0xff]
    %v128 = vld [vmem:[#allocation5 + $0x50] sm:$0xff]
    %v129 = vld [vmem:[#allocation5 + $0x58] sm:$0xff]
    %v130 = vld [vmem:[#allocation5 + $0x60] sm:$0xff]
    %v131 = vld [vmem:[#allocation5 + $0x68] sm:$0xff]
    %v132 = vld [vmem:[#allocation5 + $0x70] sm:$0xff]
    %v133 = vld [vmem:[#allocation5 + $0x78] sm:$0xff]
    %v134 = vld [vmem:[%s2] sm:$0x3]
    %v136 = vlaneseq
    %v137 = vshrl.u32 %v136, 7
    %v138 = vsub.s32 0, %v137
    %v139 = vrot.slane %v134, %v138
    %v140 = vlaneseq
    %v141 = vshrl.u32 %v140, 7
    %v142 = vsub.s32 1, %v141
    %v143 = vrot.slane %v134, %v142
    %v162 = vunpack.c.l.b16 %v118
    %v163 = vunpack.c.h.b16 %v118
    %v164 = vunpack.c.l.b16 %v119
    %v165 = vunpack.c.h.b16 %v119
    %v166 = vunpack.c.l.b16 %v120
    %v167 = vunpack.c.h.b16 %v120
    %v168 = vunpack.c.l.b16 %v121
    %v169 = vunpack.c.h.b16 %v121
    %v170 = vunpack.c.l.b16 %v122
    %v171 = vunpack.c.h.b16 %v122
    %v172 = vunpack.c.l.b16 %v123
    %v173 = vunpack.c.h.b16 %v123
    %v174 = vunpack.c.l.b16 %v124
    %v175 = vunpack.c.h.b16 %v124
    %v176 = vunpack.c.l.b16 %v125
    %v177 = vunpack.c.h.b16 %v125
    %v178 = vunpack.c.l.b16 %v126
    %v179 = vunpack.c.h.b16 %v126
    %v180 = vunpack.c.l.b16 %v127
    %v181 = vunpack.c.h.b16 %v127
    %v182 = vunpack.c.l.b16 %v128
    %v183 = vunpack.c.h.b16 %v128
    %v184 = vunpack.c.l.b16 %v129
    %v185 = vunpack.c.h.b16 %v129
    %v186 = vunpack.c.l.b16 %v130
    %v187 = vunpack.c.h.b16 %v130
    %v188 = vunpack.c.l.b16 %v131
    %v189 = vunpack.c.h.b16 %v131
    %v190 = vunpack.c.l.b16 %v132
    %v191 = vunpack.c.h.b16 %v132
    %v192 = vunpack.c.l.b16 %v133
    %v193 = vunpack.c.h.b16 %v133
    %v194 = vpack.c.b16 %v164, %v162
    %v195 = vpack.c.b16 %v165, %v163
    %v196 = vpack.c.b16 %v168, %v166
    %v197 = vpack.c.b16 %v169, %v167
    %v198 = vpack.c.b16 %v172, %v170
    %v199 = vpack.c.b16 %v173, %v171
    %v200 = vpack.c.b16 %v176, %v174
    %v201 = vpack.c.b16 %v177, %v175
    %v202 = vpack.c.b16 %v180, %v178
    %v203 = vpack.c.b16 %v181, %v179
    %v204 = vpack.c.b16 %v184, %v182
    %v205 = vpack.c.b16 %v185, %v183
    %v206 = vpack.c.b16 %v188, %v186
    %v207 = vpack.c.b16 %v189, %v187
    %v208 = vpack.c.b16 %v192, %v190
    %v209 = vpack.c.b16 %v193, %v191
    %226 = vmatprep.subr.bf16.mxu0 %v195
    %227 = vmatpush1.bf16.msra.mxu0 %v194
    %228 = vmatprep.subr.bf16.mxu0 %v197
    %229 = vmatpush1.bf16.msra.mxu0 %v196
    %230 = vmatprep.subr.bf16.mxu0 %v199
    %231 = vmatpush1.bf16.msra.mxu0 %v198
    %232 = vmatprep.subr.bf16.mxu0 %v201
    %233 = vmatpush1.bf16.msra.mxu0 %v200
    %234 = vmatprep.subr.bf16.mxu0 %v203
    %235 = vmatpush1.bf16.msra.mxu0 %v202
    %236 = vmatprep.subr.bf16.mxu0 %v205
    %237 = vmatpush1.bf16.msra.mxu0 %v204
    %238 = vmatprep.subr.bf16.mxu0 %v207
    %239 = vmatpush1.bf16.msra.mxu0 %v206
    %240 = vmatprep.subr.bf16.mxu0 %v209
    %241 = vmatpush1.bf16.msra.mxu0 %v208
    %242 = vmatprep.subr.bf16.mxu0 0
    %243 = vmatpush1.bf16.msra.mxu0 0
    %244 = vmatprep.subr.bf16.mxu0 0
    %245 = vmatpush1.bf16.msra.mxu0 0
    %246 = vmatprep.subr.bf16.mxu0 0
    %247 = vmatpush1.bf16.msra.mxu0 0
    %248 = vmatprep.subr.bf16.mxu0 0
    %249 = vmatpush1.bf16.msra.mxu0 0
    %250 = vmatprep.subr.bf16.mxu0 0
    %251 = vmatpush1.bf16.msra.mxu0 0
    %252 = vmatprep.subr.bf16.mxu0 0
    %253 = vmatpush1.bf16.msra.mxu0 0
    %254 = vmatprep.subr.bf16.mxu0 0
    %255 = vmatpush1.bf16.msra.mxu0 0
    %256 = vmatprep.subr.bf16.mxu0 0
    %257 = vmatpush1.bf16.msra.mxu0 0
    %258 = vmatprep.mubr.bf16.mxu0 0
    %259 = vmatmul.mubr.bf16.gmra.mrb[0].mxu0 %v117
    %v260 = vpop.f32.mrb[0].mxu0
    %v261 = vadd.f32 %v139, %v260
    %v262 = vpop.f32.mrb[0].mxu0
    %v263 = vadd.f32 %v143, %v262
    %v264 = vpop.f32.mrb[0].mxu0
    %v265 = vadd.f32 %v139, %v264
    %v266 = vpop.f32.mrb[0].mxu0
    %v267 = vadd.f32 %v143, %v266
    %268 = vdwg.mxu0
    %v269 = vmul.f32 %v261, 0.5
    %v270 = vmul.f32 %v263, 0.5
    %v271 = vmul.f32 %v265, 0.5
    %v272 = vmul.f32 %v267, 0.5
    %v273 = vmul.f32 %v261, 0.70710677
    %v274 = vmul.f32 %v263, 0.70710677
    %v275 = vmul.f32 %v265, 0.70710677
    %v276 = vmul.f32 %v267, 0.70710677
    %v277 = verf.f32.pop %v273
    %v278 = verf.f32.pop %v274
    %v279 = verf.f32.pop %v275
    %v280 = verf.f32.pop %v276
    %v281 = vadd.f32 %v277, 1.0
    %v282 = vadd.f32 %v278, 1.0
    %v283 = vadd.f32 %v279, 1.0
    %v284 = vadd.f32 %v280, 1.0
    %v285 = vmul.f32 %v269, %v281
    %v286 = vmul.f32 %v270, %v282
    %v287 = vmul.f32 %v271, %v283
    %v288 = vmul.f32 %v272, %v284
    %v289 = vpack.c.bf16 %v287, %v285
    %v290 = vpack.c.bf16 %v288, %v286
    %v291 = vld [vmem:[#allocation7] sm:$0xf]
    %v292 = vld [vmem:[#allocation7 + $0x4] sm:$0xf]
    %v293 = vld [vmem:[#allocation7 + $0x8] sm:$0xf]
    %v294 = vld [vmem:[#allocation7 + $0xc] sm:$0xf]
    %v295 = vld [vmem:[#allocation7 + $0x10] sm:$0xf]
    %v296 = vld [vmem:[#allocation7 + $0x14] sm:$0xf]
    %v297 = vld [vmem:[#allocation7 + $0x18] sm:$0xf]
    %v298 = vld [vmem:[#allocation7 + $0x1c] sm:$0xf]
    %v299 = vld [vmem:[#allocation7 + $0x20] sm:$0xf]
    %v300 = vld [vmem:[#allocation7 + $0x24] sm:$0xf]
    %v301 = vld [vmem:[#allocation7 + $0x28] sm:$0xf]
    %v302 = vld [vmem:[#allocation7 + $0x2c] sm:$0xf]
    %v303 = vld [vmem:[#allocation7 + $0x30] sm:$0xf]
    %v304 = vld [vmem:[#allocation7 + $0x34] sm:$0xf]
    %v305 = vld [vmem:[#allocation7 + $0x38] sm:$0xf]
    %v306 = vld [vmem:[#allocation7 + $0x3c] sm:$0xf]
    %v307 = vld [vmem:[#allocation7 + $0x40] sm:$0xf]
    %v308 = vld [vmem:[#allocation7 + $0x44] sm:$0xf]
    %v309 = vld [vmem:[#allocation7 + $0x48] sm:$0xf]
    %v310 = vld [vmem:[#allocation7 + $0x4c] sm:$0xf]
    %v311 = vld [vmem:[#allocation7 + $0x50] sm:$0xf]
    %v312 = vld [vmem:[#allocation7 + $0x54] sm:$0xf]
    %v313 = vld [vmem:[#allocation7 + $0x58] sm:$0xf]
    %v314 = vld [vmem:[#allocation7 + $0x5c] sm:$0xf]
    %v315 = vld [vmem:[#allocation7 + $0x60] sm:$0xf]
    %v316 = vld [vmem:[#allocation7 + $0x64] sm:$0xf]
    %v317 = vld [vmem:[#allocation7 + $0x68] sm:$0xf]
    %v318 = vld [vmem:[#allocation7 + $0x6c] sm:$0xf]
    %v319 = vld [vmem:[#allocation7 + $0x70] sm:$0xf]
    %v320 = vld [vmem:[#allocation7 + $0x74] sm:$0xf]
    %v321 = vld [vmem:[#allocation7 + $0x78] sm:$0xf]
    %v322 = vld [vmem:[#allocation7 + $0x7c] sm:$0xf]
    %v323 = vld [vmem:[%s4] sm:$0x1]
    %v325 = vlaneseq
    %v326 = vshrl.u32 %v325, 7
    %v327 = vsub.s32 0, %v326
    %v328 = vrot.slane %v323, %v327
    %v362 = vunpack.c.l.b16 %v291
    %v363 = vunpack.c.l.b16 %v292
    %v364 = vunpack.c.l.b16 %v293
    %v365 = vunpack.c.l.b16 %v294
    %v366 = vunpack.c.l.b16 %v295
    %v367 = vunpack.c.l.b16 %v296
    %v368 = vunpack.c.l.b16 %v297
    %v369 = vunpack.c.l.b16 %v298
    %v370 = vunpack.c.l.b16 %v299
    %v371 = vunpack.c.l.b16 %v300
    %v372 = vunpack.c.l.b16 %v301
    %v373 = vunpack.c.l.b16 %v302
    %v374 = vunpack.c.l.b16 %v303
    %v375 = vunpack.c.l.b16 %v304
    %v376 = vunpack.c.l.b16 %v305
    %v377 = vunpack.c.l.b16 %v306
    %v378 = vunpack.c.l.b16 %v307
    %v379 = vunpack.c.l.b16 %v308
    %v380 = vunpack.c.l.b16 %v309
    %v381 = vunpack.c.l.b16 %v310
    %v382 = vunpack.c.l.b16 %v311
    %v383 = vunpack.c.l.b16 %v312
    %v384 = vunpack.c.l.b16 %v313
    %v385 = vunpack.c.l.b16 %v314
    %v386 = vunpack.c.l.b16 %v315
    %v387 = vunpack.c.l.b16 %v316
    %v388 = vunpack.c.l.b16 %v317
    %v389 = vunpack.c.l.b16 %v318
    %v390 = vunpack.c.l.b16 %v319
    %v391 = vunpack.c.l.b16 %v320
    %v392 = vunpack.c.l.b16 %v321
    %v393 = vunpack.c.l.b16 %v322
    %v394 = vpack.c.b16 %v363, %v362
    %v395 = vpack.c.b16 %v365, %v364
    %v396 = vpack.c.b16 %v367, %v366
    %v397 = vpack.c.b16 %v369, %v368
    %v398 = vpack.c.b16 %v371, %v370
    %v399 = vpack.c.b16 %v373, %v372
    %v400 = vpack.c.b16 %v375, %v374
    %v401 = vpack.c.b16 %v377, %v376
    %v402 = vpack.c.b16 %v379, %v378
    %v403 = vpack.c.b16 %v381, %v380
    %v404 = vpack.c.b16 %v383, %v382
    %v405 = vpack.c.b16 %v385, %v384
    %v406 = vpack.c.b16 %v387, %v386
    %v407 = vpack.c.b16 %v389, %v388
    %v408 = vpack.c.b16 %v391, %v390
    %v409 = vpack.c.b16 %v393, %v392
    %426 = vmatprep.subr.bf16.mxu0 0
    %427 = vmatpush1.bf16.msra.mxu0 %v394
    %428 = vmatprep.subr.bf16.mxu0 0
    %429 = vmatpush1.bf16.msra.mxu0 %v395
    %430 = vmatprep.subr.bf16.mxu0 0
    %431 = vmatpush1.bf16.msra.mxu0 %v396
    %432 = vmatprep.subr.bf16.mxu0 0
    %433 = vmatpush1.bf16.msra.mxu0 %v397
    %434 = vmatprep.subr.bf16.mxu0 0
    %435 = vmatpush1.bf16.msra.mxu0 %v398
    %436 = vmatprep.subr.bf16.mxu0 0
    %437 = vmatpush1.bf16.msra.mxu0 %v399
    %438 = vmatprep.subr.bf16.mxu0 0
    %439 = vmatpush1.bf16.msra.mxu0 %v400
    %440 = vmatprep.subr.bf16.mxu0 0
    %441 = vmatpush1.bf16.msra.mxu0 %v401
    %442 = vmatprep.subr.bf16.mxu0 0
    %443 = vmatpush1.bf16.msra.mxu0 %v402
    %444 = vmatprep.subr.bf16.mxu0 0
    %445 = vmatpush1.bf16.msra.mxu0 %v403
    %446 = vmatprep.subr.bf16.mxu0 0
    %447 = vmatpush1.bf16.msra.mxu0 %v404
    %448 = vmatprep.subr.bf16.mxu0 0
    %449 = vmatpush1.bf16.msra.mxu0 %v405
    %450 = vmatprep.subr.bf16.mxu0 0
    %451 = vmatpush1.bf16.msra.mxu0 %v406
    %452 = vmatprep.subr.bf16.mxu0 0
    %453 = vmatpush1.bf16.msra.mxu0 %v407
    %454 = vmatprep.subr.bf16.mxu0 0
    %455 = vmatpush1.bf16.msra.mxu0 %v408
    %456 = vmatprep.subr.bf16.mxu0 0
    %457 = vmatpush1.bf16.msra.mxu0 %v409
    %458 = vmatprep.mubr.bf16.mxu0 %v290
    %459 = vmatmul.mubr.bf16.gmra.mrb[0].mxu0 %v289
    %v460 = vpop.f32.mrb[0].mxu0
    %v461 = vadd.f32 %v328, %v460
    %v462 = vpop.f32.mrb[0].mxu0
    %v463 = vpop.f32.mrb[0].mxu0
    %v464 = vadd.f32 %v328, %v463
    %v465 = vpop.f32.mrb[0].mxu0
    %466 = vdwg.mxu0
    %v467 = vadd.f32 %v461, %v69
    %v468 = vadd.f32 %v464, %v70
    %469 = vst [vmem:[#allocation8] sm:$0xff] %v467
    %470 = vst [vmem:[#allocation8 + $0x8] sm:$0xff] %v468
    // Predicated region
    $region42: #{tpu_custom_call.1} parent=1 // pred_check
      _
    $region43: #{tpu_custom_call.1} parent=1 // pred_check_branch
      %472 = sbr.rel (0) target = $region45
    $region44: #{tpu_custom_call.1} parent=1 // pred_region
      %s474 = ssub.s32 256, 256
      %475 = vsyncadd [#allocation4], %s474
      %s476 = sshll.u32 [#allocation8], 4
      %s477 = int_to_ptr.vmem [resolvable:$true] %s476
      %482 = dma.vmem_to_hbm [thread:$0]  %s477, 256, %s7, [#allocation4], 128, 128, 8
    $region45: #{tpu_custom_call.1} parent=1 // pred_fallthru
      _
    // Predicated region
    $region46: #{tpu_custom_call.1} parent=1 // pred_check
      _
    $region47: #{tpu_custom_call.1} parent=1 // pred_check_branch
      %484 = sbr.rel (0) target = $region49
    $region48: #{tpu_custom_call.1} parent=1 // pred_region
      %485 = dma.done [#allocation4], 256
    $region49: #{tpu_custom_call.1} parent=1 // pred_fallthru
      _
    %486 = vsyncpa [#allocation3], 1
    %487 = vsyncpa [#allocation6], 1
    %488 = vsyncpa [#allocation4], 1

</llo_original>
